<compile_context>
chip_gen: v7x
topology: tpu7x:2x2x1
jax: 0.10.0
libtpu: 0.0.40
codegen_flags: <defaults>
</compile_context>

<pallas_src>
import numpy as np
import jax
import jax.numpy as jnp
from jax.experimental import pallas as pl
from jax.experimental.pallas import tpu as pltpu


def _stft_matmul_kernel(x_ref, basis_ref, out_ref):
    # x_ref:     (NB, t_len)    bf16 block of flattened waveforms
    # basis_ref: (t_len, K_pad) bf16 static STFT basis (zero-padded to 128-mult)
    # out_ref:   (NB, K_pad)    f32 interleaved (re/im, freq, frame) spectrogram
    out_ref[...] = jnp.dot(x_ref[...], basis_ref[...],
                           preferred_element_type=jnp.float32)


def make_spectrogram_params(fs, nfft, hop_factor, f_low, f_high):
    """Replicates Spectrogram.__init__ (deterministic, no learned params)."""
    hop = int(nfft / hop_factor)
    f = np.linspace(0.0, fs / 2.0, int(nfft / 2 + 1))
    f_idx = np.atleast_1d(np.argwhere((f > f_low) & (f < f_high)).squeeze())
    return hop, int(f_idx[0]), int(f_idx[-1])


def build_stft_basis(t_len, nfft, hop, f_lo, f_hi):
    """Folds reflect pad + framing + periodic Hann + onesided DFT + band slice
    into one (t_len, 2*F*n_frames) float32 matrix."""
    pad = nfft // 2
    t_padded = t_len + 2 * pad
    n_frames = 1 + (t_padded - nfft) // hop
    freqs = np.arange(f_lo, f_hi + 1)
    n_freq = freqs.size

    # reflect-pad source index for every padded position (torch pad_mode='reflect')
    p = np.arange(t_padded) - pad
    src = np.where(p < 0, -p, np.where(p >= t_len, 2 * (t_len - 1) - p, p))

    n = np.arange(nfft)
    w = 0.5 * (1.0 - np.cos(2.0 * np.pi * n / nfft))            # periodic Hann
    ang = 2.0 * np.pi * np.outer(n, freqs) / nfft               # (nfft, F)
    cos_part = w[:, None] * np.cos(ang)                         # real
    sin_part = -w[:, None] * np.sin(ang)                        # imag

    basis = np.zeros((t_len, 2, n_freq, n_frames), dtype=np.float64)
    for t in range(n_frames):
        idx = src[t * hop: t * hop + nfft]                      # (nfft,)
        np.add.at(basis[:, 0, :, t], idx, cos_part)             # duplicates at edges
        np.add.at(basis[:, 1, :, t], idx, sin_part)
    basis = basis.reshape(t_len, 2 * n_freq * n_frames).astype(np.float32)
    return basis, n_freq, n_frames


def make_spectrogram_fn(fs, nfft, hop_factor, f_low, f_high, t_len):
    """Builds the constant basis once (on device, bf16) and returns a jitted
    forward(x) with x of shape (batch, seconds, channels, t_len)."""
    hop, f_lo, f_hi = make_spectrogram_params(fs, nfft, hop_factor, f_low, f_high)
    basis, n_freq, n_frames = build_stft_basis(t_len, nfft, hop, f_lo, f_hi)

    K = 2 * n_freq * n_frames
    K_pad = max(128, -(-K // 128) * 128)                        # lane-dense output
    basis_p = np.zeros((t_len, K_pad), dtype=np.float32)
    basis_p[:, :K] = basis
    basis_dev = jax.device_put(jnp.asarray(basis_p, dtype=jnp.bfloat16))

    @jax.jit
    def forward(x):
        batch, seconds, channels, tl = x.shape
        assert tl == t_len, "waveform length must match the prebuilt basis"
        N = batch * seconds * channels

        # Rows per block: round to 16 (bf16 sublane tile) and grow toward 256
        # before adding grid steps; one grid step at small N (single TC work).
        rows_needed = -(-N // 16) * 16
        if rows_needed <= 256:
            n_blocks, NB = 1, rows_needed
        else:
            NB = 256
            n_blocks = -(-rows_needed // NB)
        rows = n_blocks * NB

        xs = x.reshape(N, t_len).astype(jnp.bfloat16)
        if rows > N:
            xs = jnp.pad(xs, ((0, rows - N), (0, 0)))

        flops = 2 * rows * t_len * K_pad
        bytes_accessed = 2 * rows * t_len + 2 * t_len * K_pad + 4 * rows * K_pad

        out = pl.pallas_call(
            _stft_matmul_kernel,
            out_shape=jax.ShapeDtypeStruct((rows, K_pad), jnp.float32),
            grid=(n_blocks,),
            in_specs=[pl.BlockSpec((NB, t_len), lambda i: (i, 0)),
                      pl.BlockSpec((t_len, K_pad), lambda i: (0, 0))],  # constant
            out_specs=pl.BlockSpec((NB, K_pad), lambda i: (i, 0)),
            compiler_params=pltpu.CompilerParams(
                dimension_semantics=("parallel",)),
            cost_estimate=pl.CostEstimate(flops=flops,
                                          transcendentals=0,
                                          bytes_accessed=bytes_accessed),
        )(xs, basis_dev)

        out = out[:N, :K].reshape(batch, seconds, channels, 2, n_freq, n_frames)
        return jax.lax.complex(out[..., 0, :, :], out[..., 1, :, :])

    return forward, n_freq, n_frames, hop, f_lo, f_hi


def _spectrogram_reference_numpy(x, nfft, hop, f_lo, f_hi):
    """NumPy port of Spectrogram.forward (torch.stft defaults) for validation."""
    batch, seconds, channels, t_len = x.shape
    xs = x.reshape(-1, t_len).astype(np.float64)
    pad = nfft // 2
    xs_p = np.pad(xs, ((0, 0), (pad, pad)), mode="reflect")
    n_frames = 1 + (xs_p.shape[1] - nfft) // hop
    w = 0.5 * (1.0 - np.cos(2.0 * np.pi * np.arange(nfft) / nfft))
    frames = np.stack([xs_p[:, t * hop:t * hop + nfft] * w
                       for t in range(n_frames)], axis=1)        # (N, T, nfft)
    spec = np.fft.rfft(frames, n=nfft, axis=-1)                  # (N, T, nfft/2+1)
    spec = spec[:, :, f_lo:f_hi + 1]                             # band limit
    spec = np.transpose(spec, (0, 2, 1))                         # (N, F, T)
    return spec.reshape(batch, seconds, channels, spec.shape[1], n_frames)


if __name__ == "__main__":
    # fs=200 kHz, nfft=64 -> 3125 Hz bins; band (20k, 60k) -> F=13 bins (idx 7..19)
    fs, nfft, hop_factor, f_low, f_high = 200_000.0, 64, 4, 20_000.0, 60_000.0
    batch, seconds, channels, t_len = 2, 2, 4, 256

    forward, n_freq, n_frames, hop, f_lo, f_hi = make_spectrogram_fn(
        fs, nfft, hop_factor, f_low, f_high, t_len)

    key = jax.random.PRNGKey(0)
    x = jax.random.normal(key, (batch, seconds, channels, t_len), dtype=jnp.float32)

    spec = forward(x)
    spec = jax.block_until_ready(spec)

    # sanity checks
    assert spec.shape == (batch, seconds, channels, n_freq, n_frames)
    assert spec.dtype == jnp.complex64
    ref = _spectrogram_reference_numpy(np.asarray(x), nfft, hop, f_lo, f_hi)
    err = np.max(np.abs(np.asarray(spec) - ref)) / np.max(np.abs(ref))
    # tolerance covers the bf16 quantization of x and of the constant basis
    assert err < 3e-2, f"max normalized error {err}"

    print("KERNEL_OK")
</pallas_src>

<mosaic_0001>
module attributes {stable_mosaic.version = 11 : i64} {
  func.func @_stft_matmul_kernel(%arg0: i32, %arg1: memref<16x256xbf16, #tpu.memory_space<vmem>>, %arg2: memref<256x512xbf16, #tpu.memory_space<vmem>>, %arg3: memref<16x512xf32, #tpu.memory_space<vmem>>) attributes {dimension_semantics = [#tpu.dimension_semantics<parallel>], iteration_bounds = array<i64: 1>, scalar_prefetch = 0 : i64, scratch_operands = 0 : i64, tpu.core_type = #tpu.core_type<tc>, window_params = [{transform_indices = @transform_0, window_bounds = array<i64: 16, 256>}, {pipeline_mode = #tpu.pipeline_mode<synchronous>, transform_indices = @transform_1, window_bounds = array<i64: 256, 512>}, {transform_indices = @transform_2, window_bounds = array<i64: 16, 512>}]} {
    %c0 = arith.constant 0 : index
    %c0_0 = arith.constant 0 : index
    %0 = vector.load %arg1[%c0, %c0_0] : memref<16x256xbf16, #tpu.memory_space<vmem>>, vector<16x256xbf16>
    %c0_1 = arith.constant 0 : index
    %c0_2 = arith.constant 0 : index
    %1 = vector.load %arg2[%c0_1, %c0_2] : memref<256x512xbf16, #tpu.memory_space<vmem>>, vector<256x512xbf16>
    %cst = arith.constant dense<0.000000e+00> : vector<16x512xf32>
    %2 = tpu.matmul %0, %1, %cst {dimension_numbers = #tpu.dot_dimension_numbers<[1], [0], [0], [1], [0, 0, 1, 1], [], []>} : vector<16x256xbf16>, vector<256x512xbf16>, vector<16x512xf32> -> vector<16x512xf32>
    %c0_3 = arith.constant 0 : index
    %c0_4 = arith.constant 0 : index
    %3 = vector.load %arg3[%c0_3, %c0_4] : memref<16x512xf32, #tpu.memory_space<vmem>>, vector<16x512xf32>
    tpu.vector_store %arg3[%c0_3, %c0_4], %2 {strides = array<i32>} : memref<16x512xf32, #tpu.memory_space<vmem>>, vector<16x512xf32>,
    return
  }
  func.func @transform_0(%arg0: i32) -> (i32, i32) {
    %c0_i32 = arith.constant 0 : i32
    %c0_i32_0 = arith.constant 0 : i32
    return %arg0, %c0_i32 : i32, i32
  }
  func.func @transform_1(%arg0: i32) -> (i32, i32) {
    %c0_i32 = arith.constant 0 : i32
    %c0_i32_0 = arith.constant 0 : i32
    %c0_i32_1 = arith.constant 0 : i32
    return %c0_i32, %c0_i32_0 : i32, i32
  }
  func.func @transform_2(%arg0: i32) -> (i32, i32) {
    %c0_i32 = arith.constant 0 : i32
    %c0_i32_0 = arith.constant 0 : i32
    return %arg0, %c0_i32 : i32, i32
  }
}

</mosaic_0001>

<llo_original>
// kernel: custom-call
$region0: #{custom-call}
  %s0 = inlined_call_operand.vmem [shape: f32[2,2,4,13,17], index: 0, kind: input, shape index: {}]
  %s1 = inlined_call_operand.vmem [shape: f32[2,2,4,13,17], index: 1, kind: input, shape index: {}]
  %s2 = inlined_call_operand.vmem [shape: c64[2,2,4,13,17], index: 2, kind: output, shape index: {}]
  %s4 = scalar_lea.vmem %s2, 256
  %v5 = vld [vmem:[%s0] sm:$0xff]
  %6 = vst [vmem:[%s2] sm:$0xff] %v5
  %s7 = scalar_lea.vmem %s2, 8
  %s8 = scalar_lea.vmem %s0, 8
  %v9 = vld [vmem:[%s8] sm:$0xff]
  %10 = vst [vmem:[%s7] sm:$0xff] %v9
  %s11 = scalar_lea.vmem %s2, 16
  %s12 = scalar_lea.vmem %s0, 16
  %v13 = vld [vmem:[%s12] sm:$0xff]
  %14 = vst [vmem:[%s11] sm:$0xff] %v13
  %s15 = scalar_lea.vmem %s2, 24
  %s16 = scalar_lea.vmem %s0, 24
  %v17 = vld [vmem:[%s16] sm:$0xff]
  %18 = vst [vmem:[%s15] sm:$0xff] %v17
  %s19 = scalar_lea.vmem %s2, 32
  %s20 = scalar_lea.vmem %s0, 32
  %v21 = vld [vmem:[%s20] sm:$0xff]
  %22 = vst [vmem:[%s19] sm:$0xff] %v21
  %s23 = scalar_lea.vmem %s2, 40
  %s24 = scalar_lea.vmem %s0, 40
  %v25 = vld [vmem:[%s24] sm:$0xff]
  %26 = vst [vmem:[%s23] sm:$0xff] %v25
  %s27 = scalar_lea.vmem %s2, 48
  %s28 = scalar_lea.vmem %s0, 48
  %v29 = vld [vmem:[%s28] sm:$0xff]
  %30 = vst [vmem:[%s27] sm:$0xff] %v29
  %s31 = scalar_lea.vmem %s2, 56
  %s32 = scalar_lea.vmem %s0, 56
  %v33 = vld [vmem:[%s32] sm:$0xff]
  %34 = vst [vmem:[%s31] sm:$0xff] %v33
  %s35 = scalar_lea.vmem %s2, 64
  %s36 = scalar_lea.vmem %s0, 64
  %v37 = vld [vmem:[%s36] sm:$0xff]
  %38 = vst [vmem:[%s35] sm:$0xff] %v37
  %s39 = scalar_lea.vmem %s2, 72
  %s40 = scalar_lea.vmem %s0, 72
  %v41 = vld [vmem:[%s40] sm:$0xff]
  %42 = vst [vmem:[%s39] sm:$0xff] %v41
  %s43 = scalar_lea.vmem %s2, 80
  %s44 = scalar_lea.vmem %s0, 80
  %v45 = vld [vmem:[%s44] sm:$0xff]
  %46 = vst [vmem:[%s43] sm:$0xff] %v45
  %s47 = scalar_lea.vmem %s2, 88
  %s48 = scalar_lea.vmem %s0, 88
  %v49 = vld [vmem:[%s48] sm:$0xff]
  %50 = vst [vmem:[%s47] sm:$0xff] %v49
  %s51 = scalar_lea.vmem %s2, 96
  %s52 = scalar_lea.vmem %s0, 96
  %v53 = vld [vmem:[%s52] sm:$0xff]
  %54 = vst [vmem:[%s51] sm:$0xff] %v53
  %s55 = scalar_lea.vmem %s2, 104
  %s56 = scalar_lea.vmem %s0, 104
  %v57 = vld [vmem:[%s56] sm:$0xff]
  %58 = vst [vmem:[%s55] sm:$0xff] %v57
  %s59 = scalar_lea.vmem %s2, 112
  %s60 = scalar_lea.vmem %s0, 112
  %v61 = vld [vmem:[%s60] sm:$0xff]
  %62 = vst [vmem:[%s59] sm:$0xff] %v61
  %s63 = scalar_lea.vmem %s2, 120
  %s64 = scalar_lea.vmem %s0, 120
  %v65 = vld [vmem:[%s64] sm:$0xff]
  %66 = vst [vmem:[%s63] sm:$0xff] %v65
  %s67 = scalar_lea.vmem %s2, 128
  %s68 = scalar_lea.vmem %s0, 128
  %v69 = vld [vmem:[%s68] sm:$0xff]
  %70 = vst [vmem:[%s67] sm:$0xff] %v69
  %s71 = scalar_lea.vmem %s2, 136
  %s72 = scalar_lea.vmem %s0, 136
  %v73 = vld [vmem:[%s72] sm:$0xff]
  %74 = vst [vmem:[%s71] sm:$0xff] %v73
  %s75 = scalar_lea.vmem %s2, 144
  %s76 = scalar_lea.vmem %s0, 144
  %v77 = vld [vmem:[%s76] sm:$0xff]
  %78 = vst [vmem:[%s75] sm:$0xff] %v77
  %s79 = scalar_lea.vmem %s2, 152
  %s80 = scalar_lea.vmem %s0, 152
  %v81 = vld [vmem:[%s80] sm:$0xff]
  %82 = vst [vmem:[%s79] sm:$0xff] %v81
  %s83 = scalar_lea.vmem %s2, 160
  %s84 = scalar_lea.vmem %s0, 160
  %v85 = vld [vmem:[%s84] sm:$0xff]
  %86 = vst [vmem:[%s83] sm:$0xff] %v85
  %s87 = scalar_lea.vmem %s2, 168
  %s88 = scalar_lea.vmem %s0, 168
  %v89 = vld [vmem:[%s88] sm:$0xff]
  %90 = vst [vmem:[%s87] sm:$0xff] %v89
  %s91 = scalar_lea.vmem %s2, 176
  %s92 = scalar_lea.vmem %s0, 176
  %v93 = vld [vmem:[%s92] sm:$0xff]
  %94 = vst [vmem:[%s91] sm:$0xff] %v93
  %s95 = scalar_lea.vmem %s2, 184
  %s96 = scalar_lea.vmem %s0, 184
  %v97 = vld [vmem:[%s96] sm:$0xff]
  %98 = vst [vmem:[%s95] sm:$0xff] %v97
  %s99 = scalar_lea.vmem %s2, 192
  %s100 = scalar_lea.vmem %s0, 192
  %v101 = vld [vmem:[%s100] sm:$0xff]
  %102 = vst [vmem:[%s99] sm:$0xff] %v101
  %s103 = scalar_lea.vmem %s2, 200
  %s104 = scalar_lea.vmem %s0, 200
  %v105 = vld [vmem:[%s104] sm:$0xff]
  %106 = vst [vmem:[%s103] sm:$0xff] %v105
  %s107 = scalar_lea.vmem %s2, 208
  %s108 = scalar_lea.vmem %s0, 208
  %v109 = vld [vmem:[%s108] sm:$0xff]
  %110 = vst [vmem:[%s107] sm:$0xff] %v109
  %s111 = scalar_lea.vmem %s2, 216
  %s112 = scalar_lea.vmem %s0, 216
  %v113 = vld [vmem:[%s112] sm:$0xff]
  %114 = vst [vmem:[%s111] sm:$0xff] %v113
  %s115 = scalar_lea.vmem %s2, 224
  %s116 = scalar_lea.vmem %s0, 224
  %v117 = vld [vmem:[%s116] sm:$0xff]
  %118 = vst [vmem:[%s115] sm:$0xff] %v117
  %s119 = scalar_lea.vmem %s2, 232
  %s120 = scalar_lea.vmem %s0, 232
  %v121 = vld [vmem:[%s120] sm:$0xff]
  %122 = vst [vmem:[%s119] sm:$0xff] %v121
  %s123 = scalar_lea.vmem %s2, 240
  %s124 = scalar_lea.vmem %s0, 240
  %v125 = vld [vmem:[%s124] sm:$0xff]
  %126 = vst [vmem:[%s123] sm:$0xff] %v125
  %s127 = scalar_lea.vmem %s2, 248
  %s128 = scalar_lea.vmem %s0, 248
  %v129 = vld [vmem:[%s128] sm:$0xff]
  %130 = vst [vmem:[%s127] sm:$0xff] %v129
  %v131 = vld [vmem:[%s1] sm:$0xff]
  %132 = vst [vmem:[%s4] sm:$0xff] %v131
  %s133 = scalar_lea.vmem %s4, 8
  %s134 = scalar_lea.vmem %s1, 8
  %v135 = vld [vmem:[%s134] sm:$0xff]
  %136 = vst [vmem:[%s133] sm:$0xff] %v135
  %s137 = scalar_lea.vmem %s4, 16
  %s138 = scalar_lea.vmem %s1, 16
  %v139 = vld [vmem:[%s138] sm:$0xff]
  %140 = vst [vmem:[%s137] sm:$0xff] %v139
  %s141 = scalar_lea.vmem %s4, 24
  %s142 = scalar_lea.vmem %s1, 24
  %v143 = vld [vmem:[%s142] sm:$0xff]
  %144 = vst [vmem:[%s141] sm:$0xff] %v143
  %s145 = scalar_lea.vmem %s4, 32
  %s146 = scalar_lea.vmem %s1, 32
  %v147 = vld [vmem:[%s146] sm:$0xff]
  %148 = vst [vmem:[%s145] sm:$0xff] %v147
  %s149 = scalar_lea.vmem %s4, 40
  %s150 = scalar_lea.vmem %s1, 40
  %v151 = vld [vmem:[%s150] sm:$0xff]
  %152 = vst [vmem:[%s149] sm:$0xff] %v151
  %s153 = scalar_lea.vmem %s4, 48
  %s154 = scalar_lea.vmem %s1, 48
  %v155 = vld [vmem:[%s154] sm:$0xff]
  %156 = vst [vmem:[%s153] sm:$0xff] %v155
  %s157 = scalar_lea.vmem %s4, 56
  %s158 = scalar_lea.vmem %s1, 56
  %v159 = vld [vmem:[%s158] sm:$0xff]
  %160 = vst [vmem:[%s157] sm:$0xff] %v159
  %s161 = scalar_lea.vmem %s4, 64
  %s162 = scalar_lea.vmem %s1, 64
  %v163 = vld [vmem:[%s162] sm:$0xff]
  %164 = vst [vmem:[%s161] sm:$0xff] %v163
  %s165 = scalar_lea.vmem %s4, 72
  %s166 = scalar_lea.vmem %s1, 72
  %v167 = vld [vmem:[%s166] sm:$0xff]
  %168 = vst [vmem:[%s165] sm:$0xff] %v167
  %s169 = scalar_lea.vmem %s4, 80
  %s170 = scalar_lea.vmem %s1, 80
  %v171 = vld [vmem:[%s170] sm:$0xff]
  %172 = vst [vmem:[%s169] sm:$0xff] %v171
  %s173 = scalar_lea.vmem %s4, 88
  %s174 = scalar_lea.vmem %s1, 88
  %v175 = vld [vmem:[%s174] sm:$0xff]
  %176 = vst [vmem:[%s173] sm:$0xff] %v175
  %s177 = scalar_lea.vmem %s4, 96
  %s178 = scalar_lea.vmem %s1, 96
  %v179 = vld [vmem:[%s178] sm:$0xff]
  %180 = vst [vmem:[%s177] sm:$0xff] %v179
  %s181 = scalar_lea.vmem %s4, 104
  %s182 = scalar_lea.vmem %s1, 104
  %v183 = vld [vmem:[%s182] sm:$0xff]
  %184 = vst [vmem:[%s181] sm:$0xff] %v183
  %s185 = scalar_lea.vmem %s4, 112
  %s186 = scalar_lea.vmem %s1, 112
  %v187 = vld [vmem:[%s186] sm:$0xff]
  %188 = vst [vmem:[%s185] sm:$0xff] %v187
  %s189 = scalar_lea.vmem %s4, 120
  %s190 = scalar_lea.vmem %s1, 120
  %v191 = vld [vmem:[%s190] sm:$0xff]
  %192 = vst [vmem:[%s189] sm:$0xff] %v191
  %s193 = scalar_lea.vmem %s4, 128
  %s194 = scalar_lea.vmem %s1, 128
  %v195 = vld [vmem:[%s194] sm:$0xff]
  %196 = vst [vmem:[%s193] sm:$0xff] %v195
  %s197 = scalar_lea.vmem %s4, 136
  %s198 = scalar_lea.vmem %s1, 136
  %v199 = vld [vmem:[%s198] sm:$0xff]
  %200 = vst [vmem:[%s197] sm:$0xff] %v199
  %s201 = scalar_lea.vmem %s4, 144
  %s202 = scalar_lea.vmem %s1, 144
  %v203 = vld [vmem:[%s202] sm:$0xff]
  %204 = vst [vmem:[%s201] sm:$0xff] %v203
  %s205 = scalar_lea.vmem %s4, 152
  %s206 = scalar_lea.vmem %s1, 152
  %v207 = vld [vmem:[%s206] sm:$0xff]
  %208 = vst [vmem:[%s205] sm:$0xff] %v207
  %s209 = scalar_lea.vmem %s4, 160
  %s210 = scalar_lea.vmem %s1, 160
  %v211 = vld [vmem:[%s210] sm:$0xff]
  %212 = vst [vmem:[%s209] sm:$0xff] %v211
  %s213 = scalar_lea.vmem %s4, 168
  %s214 = scalar_lea.vmem %s1, 168
  %v215 = vld [vmem:[%s214] sm:$0xff]
  %216 = vst [vmem:[%s213] sm:$0xff] %v215
  %s217 = scalar_lea.vmem %s4, 176
  %s218 = scalar_lea.vmem %s1, 176
  %v219 = vld [vmem:[%s218] sm:$0xff]
  %220 = vst [vmem:[%s217] sm:$0xff] %v219
  %s221 = scalar_lea.vmem %s4, 184
  %s222 = scalar_lea.vmem %s1, 184
  %v223 = vld [vmem:[%s222] sm:$0xff]
  %224 = vst [vmem:[%s221] sm:$0xff] %v223
  %s225 = scalar_lea.vmem %s4, 192
  %s226 = scalar_lea.vmem %s1, 192
  %v227 = vld [vmem:[%s226] sm:$0xff]
  %228 = vst [vmem:[%s225] sm:$0xff] %v227
  %s229 = scalar_lea.vmem %s4, 200
  %s230 = scalar_lea.vmem %s1, 200
  %v231 = vld [vmem:[%s230] sm:$0xff]
  %232 = vst [vmem:[%s229] sm:$0xff] %v231
  %s233 = scalar_lea.vmem %s4, 208
  %s234 = scalar_lea.vmem %s1, 208
  %v235 = vld [vmem:[%s234] sm:$0xff]
  %236 = vst [vmem:[%s233] sm:$0xff] %v235
  %s237 = scalar_lea.vmem %s4, 216
  %s238 = scalar_lea.vmem %s1, 216
  %v239 = vld [vmem:[%s238] sm:$0xff]
  %240 = vst [vmem:[%s237] sm:$0xff] %v239
  %s241 = scalar_lea.vmem %s4, 224
  %s242 = scalar_lea.vmem %s1, 224
  %v243 = vld [vmem:[%s242] sm:$0xff]
  %244 = vst [vmem:[%s241] sm:$0xff] %v243
  %s245 = scalar_lea.vmem %s4, 232
  %s246 = scalar_lea.vmem %s1, 232
  %v247 = vld [vmem:[%s246] sm:$0xff]
  %248 = vst [vmem:[%s245] sm:$0xff] %v247
  %s249 = scalar_lea.vmem %s4, 240
  %s250 = scalar_lea.vmem %s1, 240
  %v251 = vld [vmem:[%s250] sm:$0xff]
  %252 = vst [vmem:[%s249] sm:$0xff] %v251
  %s253 = scalar_lea.vmem %s4, 248
  %s254 = scalar_lea.vmem %s1, 248
  %v255 = vld [vmem:[%s254] sm:$0xff]
  %256 = vst [vmem:[%s253] sm:$0xff] %v255

// kernel: forward.1
$region0: #{forward.1}
  #allocation0 [shape = 'u32[]', space=smem, size = 0x4, offset = 0x4, fixed_abs, tag = 'smem constant byte address 0x4 - core index']
  #allocation1 [shape = 'u32[144,128]{1,0:T(1,128)}', space=vmem, size = 0x12000, scoped, tag = 'internal scratch']
  %s0 = inlined_call_operand.vmem [shape: bf16[16,256], index: 0, kind: input, shape index: {}]
  %s1 = inlined_call_operand.vmem [shape: bf16[256,512], index: 1, kind: input, shape index: {}]
  %s2 = inlined_call_operand.vmem [shape: f32[16,512], index: 2, kind: output, shape index: {}]
  %s3 = sld [smem:[#allocation0]]
  $region18: #{forward.1} parent=0
    _
  %s5 = ssub.s32 1, %s3
  %s6 = scalar_select 0, %s5, %s3
  // Predicated region
  $region2: #{forward.1} parent=0 // pred_check
    _
  $region3: #{forward.1} parent=0 // pred_check_branch
    %8 = sbr.rel (0) target = $region5
  $region4: #{forward.1} parent=0 // pred_region
    _
  $region5: #{forward.1} parent=0 // pred_fallthru
    _
  // Predicated region
  $region6: #{forward.1} parent=0 // pred_check
    _
  $region7: #{forward.1} parent=0 // pred_check_branch
    %10 = sbr.rel (0) target = $region9
  $region8: #{forward.1} parent=0 // pred_region
    _
  $region9: #{forward.1} parent=0 // pred_fallthru
    _
  %v11 = vld [vmem:[%s0] sm:$0xff]
  %v12 = vld [vmem:[%s0 + $0x8] sm:$0xff]
  %v13 = vld [vmem:[%s1] sm:$0xff]
  %v14 = vld [vmem:[%s1 + $0x8] sm:$0xff]
  %v15 = vld [vmem:[%s1 + $0x10] sm:$0xff]
  %v16 = vld [vmem:[%s1 + $0x18] sm:$0xff]
  %v17 = vld [vmem:[%s1 + $0x20] sm:$0xff]
  %v18 = vld [vmem:[%s1 + $0x28] sm:$0xff]
  %v19 = vld [vmem:[%s1 + $0x30] sm:$0xff]
  %v20 = vld [vmem:[%s1 + $0x38] sm:$0xff]
  %v21 = vld [vmem:[%s1 + $0x40] sm:$0xff]
  %v22 = vld [vmem:[%s1 + $0x48] sm:$0xff]
  %v23 = vld [vmem:[%s1 + $0x50] sm:$0xff]
  %v24 = vld [vmem:[%s1 + $0x58] sm:$0xff]
  %v25 = vld [vmem:[%s1 + $0x60] sm:$0xff]
  %v26 = vld [vmem:[%s1 + $0x68] sm:$0xff]
  %v27 = vld [vmem:[%s1 + $0x70] sm:$0xff]
  %v28 = vld [vmem:[%s1 + $0x78] sm:$0xff]
  %v29 = vld [vmem:[%s1 + $0x80] sm:$0xff]
  %v30 = vld [vmem:[%s1 + $0x88] sm:$0xff]
  %v31 = vld [vmem:[%s1 + $0x90] sm:$0xff]
  %v32 = vld [vmem:[%s1 + $0x98] sm:$0xff]
  %v33 = vld [vmem:[%s1 + $0xa0] sm:$0xff]
  %v34 = vld [vmem:[%s1 + $0xa8] sm:$0xff]
  %v35 = vld [vmem:[%s1 + $0xb0] sm:$0xff]
  %v36 = vld [vmem:[%s1 + $0xb8] sm:$0xff]
  %v37 = vld [vmem:[%s1 + $0xc0] sm:$0xff]
  %v38 = vld [vmem:[%s1 + $0xc8] sm:$0xff]
  %v39 = vld [vmem:[%s1 + $0xd0] sm:$0xff]
  %v40 = vld [vmem:[%s1 + $0xd8] sm:$0xff]
  %v41 = vld [vmem:[%s1 + $0xe0] sm:$0xff]
  %v42 = vld [vmem:[%s1 + $0xe8] sm:$0xff]
  %v43 = vld [vmem:[%s1 + $0xf0] sm:$0xff]
  %v44 = vld [vmem:[%s1 + $0xf8] sm:$0xff]
  %v45 = vld [vmem:[%s1 + $0x100] sm:$0xff]
  %v46 = vld [vmem:[%s1 + $0x108] sm:$0xff]
  %v47 = vld [vmem:[%s1 + $0x110] sm:$0xff]
  %v48 = vld [vmem:[%s1 + $0x118] sm:$0xff]
  %v49 = vld [vmem:[%s1 + $0x120] sm:$0xff]
  %v50 = vld [vmem:[%s1 + $0x128] sm:$0xff]
  %v51 = vld [vmem:[%s1 + $0x130] sm:$0xff]
  %v52 = vld [vmem:[%s1 + $0x138] sm:$0xff]
  %v53 = vld [vmem:[%s1 + $0x140] sm:$0xff]
  %v54 = vld [vmem:[%s1 + $0x148] sm:$0xff]
  %v55 = vld [vmem:[%s1 + $0x150] sm:$0xff]
  %v56 = vld [vmem:[%s1 + $0x158] sm:$0xff]
  %v57 = vld [vmem:[%s1 + $0x160] sm:$0xff]
  %v58 = vld [vmem:[%s1 + $0x168] sm:$0xff]
  %v59 = vld [vmem:[%s1 + $0x170] sm:$0xff]
  %v60 = vld [vmem:[%s1 + $0x178] sm:$0xff]
  %v61 = vld [vmem:[%s1 + $0x180] sm:$0xff]
  %v62 = vld [vmem:[%s1 + $0x188] sm:$0xff]
  %v63 = vld [vmem:[%s1 + $0x190] sm:$0xff]
  %v64 = vld [vmem:[%s1 + $0x198] sm:$0xff]
  %v65 = vld [vmem:[%s1 + $0x1a0] sm:$0xff]
  %v66 = vld [vmem:[%s1 + $0x1a8] sm:$0xff]
  %v67 = vld [vmem:[%s1 + $0x1b0] sm:$0xff]
  %v68 = vld [vmem:[%s1 + $0x1b8] sm:$0xff]
  %v69 = vld [vmem:[%s1 + $0x1c0] sm:$0xff]
  %v70 = vld [vmem:[%s1 + $0x1c8] sm:$0xff]
  %v71 = vld [vmem:[%s1 + $0x1d0] sm:$0xff]
  %v72 = vld [vmem:[%s1 + $0x1d8] sm:$0xff]
  %v73 = vld [vmem:[%s1 + $0x1e0] sm:$0xff]
  %v74 = vld [vmem:[%s1 + $0x1e8] sm:$0xff]
  %v75 = vld [vmem:[%s1 + $0x1f0] sm:$0xff]
  %v76 = vld [vmem:[%s1 + $0x1f8] sm:$0xff]
  %v79 = vunpack.c.l.b16 %v11
  %v80 = vunpack.c.h.b16 %v11
  %v81 = vunpack.c.l.b16 %v12
  %v82 = vunpack.c.h.b16 %v12
  %v83 = vpack.c.b16 %v81, %v79
  %v84 = vpack.c.b16 %v82, %v80
  %v151 = vunpack.c.l.b16 %v13
  %v152 = vunpack.c.h.b16 %v13
  %v153 = vunpack.c.l.b16 %v14
  %v154 = vunpack.c.h.b16 %v14
  %v155 = vunpack.c.l.b16 %v15
  %v156 = vunpack.c.h.b16 %v15
  %v157 = vunpack.c.l.b16 %v16
  %v158 = vunpack.c.h.b16 %v16
  %v159 = vunpack.c.l.b16 %v17
  %v160 = vunpack.c.h.b16 %v17
  %v161 = vunpack.c.l.b16 %v18
  %v162 = vunpack.c.h.b16 %v18
  %v163 = vunpack.c.l.b16 %v19
  %v164 = vunpack.c.h.b16 %v19
  %v165 = vunpack.c.l.b16 %v20
  %v166 = vunpack.c.h.b16 %v20
  %v167 = vunpack.c.l.b16 %v21
  %v168 = vunpack.c.h.b16 %v21
  %v169 = vunpack.c.l.b16 %v22
  %v170 = vunpack.c.h.b16 %v22
  %v171 = vunpack.c.l.b16 %v23
  %v172 = vunpack.c.h.b16 %v23
  %v173 = vunpack.c.l.b16 %v24
  %v174 = vunpack.c.h.b16 %v24
  %v175 = vunpack.c.l.b16 %v25
  %v176 = vunpack.c.h.b16 %v25
  %v177 = vunpack.c.l.b16 %v26
  %v178 = vunpack.c.h.b16 %v26
  %v179 = vunpack.c.l.b16 %v27
  %v180 = vunpack.c.h.b16 %v27
  %v181 = vunpack.c.l.b16 %v28
  %v182 = vunpack.c.h.b16 %v28
  %v183 = vunpack.c.l.b16 %v29
  %v184 = vunpack.c.h.b16 %v29
  %v185 = vunpack.c.l.b16 %v30
  %v186 = vunpack.c.h.b16 %v30
  %v187 = vunpack.c.l.b16 %v31
  %v188 = vunpack.c.h.b16 %v31
  %v189 = vunpack.c.l.b16 %v32
  %v190 = vunpack.c.h.b16 %v32
  %v191 = vunpack.c.l.b16 %v33
  %v192 = vunpack.c.h.b16 %v33
  %v193 = vunpack.c.l.b16 %v34
  %v194 = vunpack.c.h.b16 %v34
  %v195 = vunpack.c.l.b16 %v35
  %v196 = vunpack.c.h.b16 %v35
  %v197 = vunpack.c.l.b16 %v36
  %v198 = vunpack.c.h.b16 %v36
  %v199 = vunpack.c.l.b16 %v37
  %v200 = vunpack.c.h.b16 %v37
  %v201 = vunpack.c.l.b16 %v38
  %v202 = vunpack.c.h.b16 %v38
  %v203 = vunpack.c.l.b16 %v39
  %v204 = vunpack.c.h.b16 %v39
  %v205 = vunpack.c.l.b16 %v40
  %v206 = vunpack.c.h.b16 %v40
  %v207 = vunpack.c.l.b16 %v41
  %v208 = vunpack.c.h.b16 %v41
  %v209 = vunpack.c.l.b16 %v42
  %v210 = vunpack.c.h.b16 %v42
  %v211 = vunpack.c.l.b16 %v43
  %v212 = vunpack.c.h.b16 %v43
  %v213 = vunpack.c.l.b16 %v44
  %v214 = vunpack.c.h.b16 %v44
  %v215 = vunpack.c.l.b16 %v45
  %v216 = vunpack.c.h.b16 %v45
  %v217 = vunpack.c.l.b16 %v46
  %v218 = vunpack.c.h.b16 %v46
  %v219 = vunpack.c.l.b16 %v47
  %v220 = vunpack.c.h.b16 %v47
  %v221 = vunpack.c.l.b16 %v48
  %v222 = vunpack.c.h.b16 %v48
  %v223 = vunpack.c.l.b16 %v49
  %v224 = vunpack.c.h.b16 %v49
  %v225 = vunpack.c.l.b16 %v50
  %v226 = vunpack.c.h.b16 %v50
  %v227 = vunpack.c.l.b16 %v51
  %v228 = vunpack.c.h.b16 %v51
  %v229 = vunpack.c.l.b16 %v52
  %v230 = vunpack.c.h.b16 %v52
  %v231 = vunpack.c.l.b16 %v53
  %v232 = vunpack.c.h.b16 %v53
  %v233 = vunpack.c.l.b16 %v54
  %v234 = vunpack.c.h.b16 %v54
  %v235 = vunpack.c.l.b16 %v55
  %v236 = vunpack.c.h.b16 %v55
  %v237 = vunpack.c.l.b16 %v56
  %v238 = vunpack.c.h.b16 %v56
  %v239 = vunpack.c.l.b16 %v57
  %v240 = vunpack.c.h.b16 %v57
  %v241 = vunpack.c.l.b16 %v58
  %v242 = vunpack.c.h.b16 %v58
  %v243 = vunpack.c.l.b16 %v59
  %v244 = vunpack.c.h.b16 %v59
  %v245 = vunpack.c.l.b16 %v60
  %v246 = vunpack.c.h.b16 %v60
  %v247 = vunpack.c.l.b16 %v61
  %v248 = vunpack.c.h.b16 %v61
  %v249 = vunpack.c.l.b16 %v62
  %v250 = vunpack.c.h.b16 %v62
  %v251 = vunpack.c.l.b16 %v63
  %v252 = vunpack.c.h.b16 %v63
  %v253 = vunpack.c.l.b16 %v64
  %v254 = vunpack.c.h.b16 %v64
  %v255 = vunpack.c.l.b16 %v65
  %v256 = vunpack.c.h.b16 %v65
  %v257 = vunpack.c.l.b16 %v66
  %v258 = vunpack.c.h.b16 %v66
  %v259 = vunpack.c.l.b16 %v67
  %v260 = vunpack.c.h.b16 %v67
  %v261 = vunpack.c.l.b16 %v68
  %v262 = vunpack.c.h.b16 %v68
  %v263 = vunpack.c.l.b16 %v69
  %v264 = vunpack.c.h.b16 %v69
  %v265 = vunpack.c.l.b16 %v70
  %v266 = vunpack.c.h.b16 %v70
  %v267 = vunpack.c.l.b16 %v71
  %v268 = vunpack.c.h.b16 %v71
  %v269 = vunpack.c.l.b16 %v72
  %v270 = vunpack.c.h.b16 %v72
  %v271 = vunpack.c.l.b16 %v73
  %v272 = vunpack.c.h.b16 %v73
  %v273 = vunpack.c.l.b16 %v74
  %v274 = vunpack.c.h.b16 %v74
  %v275 = vunpack.c.l.b16 %v75
  %v276 = vunpack.c.h.b16 %v75
  %v277 = vunpack.c.l.b16 %v76
  %v278 = vunpack.c.h.b16 %v76
  %v279 = vpack.c.b16 %v155, %v151
  %v280 = vpack.c.b16 %v156, %v152
  %v281 = vpack.c.b16 %v157, %v153
  %v282 = vpack.c.b16 %v158, %v154
  %v283 = vpack.c.b16 %v163, %v159
  %v284 = vpack.c.b16 %v164, %v160
  %v285 = vpack.c.b16 %v165, %v161
  %v286 = vpack.c.b16 %v166, %v162
  %v287 = vpack.c.b16 %v171, %v167
  %v288 = vpack.c.b16 %v172, %v168
  %v289 = vpack.c.b16 %v173, %v169
  %v290 = vpack.c.b16 %v174, %v170
  %v291 = vpack.c.b16 %v179, %v175
  %v292 = vpack.c.b16 %v180, %v176
  %v293 = vpack.c.b16 %v181, %v177
  %v294 = vpack.c.b16 %v182, %v178
  %v295 = vpack.c.b16 %v187, %v183
  %v296 = vpack.c.b16 %v188, %v184
  %v297 = vpack.c.b16 %v189, %v185
  %v298 = vpack.c.b16 %v190, %v186
  %v299 = vpack.c.b16 %v195, %v191
  %v300 = vpack.c.b16 %v196, %v192
  %v301 = vpack.c.b16 %v197, %v193
  %v302 = vpack.c.b16 %v198, %v194
  %v303 = vpack.c.b16 %v203, %v199
  %v304 = vpack.c.b16 %v204, %v200
  %v305 = vpack.c.b16 %v205, %v201
  %v306 = vpack.c.b16 %v206, %v202
  %v307 = vpack.c.b16 %v211, %v207
  %v308 = vpack.c.b16 %v212, %v208
  %v309 = vpack.c.b16 %v213, %v209
  %v310 = vpack.c.b16 %v214, %v210
  %v311 = vpack.c.b16 %v219, %v215
  %v312 = vpack.c.b16 %v220, %v216
  %v313 = vpack.c.b16 %v221, %v217
  %v314 = vpack.c.b16 %v222, %v218
  %v315 = vpack.c.b16 %v227, %v223
  %v316 = vpack.c.b16 %v228, %v224
  %v317 = vpack.c.b16 %v229, %v225
  %v318 = vpack.c.b16 %v230, %v226
  %v319 = vpack.c.b16 %v235, %v231
  %v320 = vpack.c.b16 %v236, %v232
  %v321 = vpack.c.b16 %v237, %v233
  %v322 = vpack.c.b16 %v238, %v234
  %v323 = vpack.c.b16 %v243, %v239
  %v324 = vpack.c.b16 %v244, %v240
  %v325 = vpack.c.b16 %v245, %v241
  %v326 = vpack.c.b16 %v246, %v242
  %v327 = vpack.c.b16 %v251, %v247
  %v328 = vpack.c.b16 %v252, %v248
  %v329 = vpack.c.b16 %v253, %v249
  %v330 = vpack.c.b16 %v254, %v250
  %v331 = vpack.c.b16 %v259, %v255
  %v332 = vpack.c.b16 %v260, %v256
  %v333 = vpack.c.b16 %v261, %v257
  %v334 = vpack.c.b16 %v262, %v258
  %v335 = vpack.c.b16 %v267, %v263
  %v336 = vpack.c.b16 %v268, %v264
  %v337 = vpack.c.b16 %v269, %v265
  %v338 = vpack.c.b16 %v270, %v266
  %v339 = vpack.c.b16 %v275, %v271
  %v340 = vpack.c.b16 %v276, %v272
  %v341 = vpack.c.b16 %v277, %v273
  %v342 = vpack.c.b16 %v278, %v274
  %407 = vmatprep.subr.bf16.mxu0 %v280
  %408 = vmatpush1.bf16.msra.mxu0 %v279
  %409 = vmatprep.subr.bf16.mxu0 %v284
  %410 = vmatpush1.bf16.msra.mxu0 %v283
  %411 = vmatprep.subr.bf16.mxu0 %v288
  %412 = vmatpush1.bf16.msra.mxu0 %v287
  %413 = vmatprep.subr.bf16.mxu0 %v292
  %414 = vmatpush1.bf16.msra.mxu0 %v291
  %415 = vmatprep.subr.bf16.mxu0 %v296
  %416 = vmatpush1.bf16.msra.mxu0 %v295
  %417 = vmatprep.subr.bf16.mxu0 %v300
  %418 = vmatpush1.bf16.msra.mxu0 %v299
  %419 = vmatprep.subr.bf16.mxu0 %v304
  %420 = vmatpush1.bf16.msra.mxu0 %v303
  %421 = vmatprep.subr.bf16.mxu0 %v308
  %422 = vmatpush1.bf16.msra.mxu0 %v307
  %423 = vmatprep.subr.bf16.mxu0 %v312
  %424 = vmatpush1.bf16.msra.mxu0 %v311
  %425 = vmatprep.subr.bf16.mxu0 %v316
  %426 = vmatpush1.bf16.msra.mxu0 %v315
  %427 = vmatprep.subr.bf16.mxu0 %v320
  %428 = vmatpush1.bf16.msra.mxu0 %v319
  %429 = vmatprep.subr.bf16.mxu0 %v324
  %430 = vmatpush1.bf16.msra.mxu0 %v323
  %431 = vmatprep.subr.bf16.mxu0 %v328
  %432 = vmatpush1.bf16.msra.mxu0 %v327
  %433 = vmatprep.subr.bf16.mxu0 %v332
  %434 = vmatpush1.bf16.msra.mxu0 %v331
  %435 = vmatprep.subr.bf16.mxu0 %v336
  %436 = vmatpush1.bf16.msra.mxu0 %v335
  %437 = vmatprep.subr.bf16.mxu0 %v340
  %438 = vmatpush1.bf16.msra.mxu0 %v339
  %439 = vmatprep.mubr.bf16.mxu0 %v84
  %440 = vmatmul.mubr.bf16.gmra.mrb[0].mxu0 %v83
  %v441 = vpop.f32.mrb[0].mxu0
  %v442 = vadd.f32 0.0, %v441
  %v443 = vpop.f32.mrb[0].mxu0
  %v444 = vadd.f32 0.0, %v443
  %v445 = vpop.f32.mrb[0].mxu0
  %v446 = vadd.f32 0.0, %v445
  %v447 = vpop.f32.mrb[0].mxu0
  %v448 = vadd.f32 0.0, %v447
  %449 = vdwg.mxu0
  %450 = vmatprep.subr.bf16.mxu0 %v282
  %451 = vmatpush1.bf16.msra.mxu0 %v281
  %452 = vmatprep.subr.bf16.mxu0 %v286
  %453 = vmatpush1.bf16.msra.mxu0 %v285
  %454 = vmatprep.subr.bf16.mxu0 %v290
  %455 = vmatpush1.bf16.msra.mxu0 %v289
  %456 = vmatprep.subr.bf16.mxu0 %v294
  %457 = vmatpush1.bf16.msra.mxu0 %v293
  %458 = vmatprep.subr.bf16.mxu0 %v298
  %459 = vmatpush1.bf16.msra.mxu0 %v297
  %460 = vmatprep.subr.bf16.mxu0 %v302
  %461 = vmatpush1.bf16.msra.mxu0 %v301
  %462 = vmatprep.subr.bf16.mxu0 %v306
  %463 = vmatpush1.bf16.msra.mxu0 %v305
  %464 = vmatprep.subr.bf16.mxu0 %v310
  %465 = vmatpush1.bf16.msra.mxu0 %v309
  %466 = vmatprep.subr.bf16.mxu0 %v314
  %467 = vmatpush1.bf16.msra.mxu0 %v313
  %468 = vmatprep.subr.bf16.mxu0 %v318
  %469 = vmatpush1.bf16.msra.mxu0 %v317
  %470 = vmatprep.subr.bf16.mxu0 %v322
  %471 = vmatpush1.bf16.msra.mxu0 %v321
  %472 = vmatprep.subr.bf16.mxu0 %v326
  %473 = vmatpush1.bf16.msra.mxu0 %v325
  %474 = vmatprep.subr.bf16.mxu0 %v330
  %475 = vmatpush1.bf16.msra.mxu0 %v329
  %476 = vmatprep.subr.bf16.mxu0 %v334
  %477 = vmatpush1.bf16.msra.mxu0 %v333
  %478 = vmatprep.subr.bf16.mxu0 %v338
  %479 = vmatpush1.bf16.msra.mxu0 %v337
  %480 = vmatprep.subr.bf16.mxu0 %v342
  %481 = vmatpush1.bf16.msra.mxu0 %v341
  %482 = vmatprep.mubr.bf16.mxu0 %v84
  %483 = vmatmul.mubr.bf16.gmra.mrb[0].mxu0 %v83
  %v484 = vpop.f32.mrb[0].mxu0
  %v485 = vadd.f32 0.0, %v484
  %v486 = vpop.f32.mrb[0].mxu0
  %v487 = vadd.f32 0.0, %v486
  %v488 = vpop.f32.mrb[0].mxu0
  %v489 = vadd.f32 0.0, %v488
  %v490 = vpop.f32.mrb[0].mxu0
  %v491 = vadd.f32 0.0, %v490
  %492 = vdwg.mxu0
  %493 = vst [vmem:[%s2] sm:$0xff] %v442
  %494 = vst [vmem:[%s2 + $0x8] sm:$0xff] %v444
  %495 = vst [vmem:[%s2 + $0x10] sm:$0xff] %v485
  %496 = vst [vmem:[%s2 + $0x18] sm:$0xff] %v487
  %497 = vst [vmem:[%s2 + $0x20] sm:$0xff] %v446
  %498 = vst [vmem:[%s2 + $0x28] sm:$0xff] %v448
  %499 = vst [vmem:[%s2 + $0x30] sm:$0xff] %v489
  %500 = vst [vmem:[%s2 + $0x38] sm:$0xff] %v491
  // Predicated region
  $region10: #{forward.1} parent=0 // pred_check
    _
  $region11: #{forward.1} parent=0 // pred_check_branch
    %502 = sbr.rel (0) target = $region13
  $region12: #{forward.1} parent=0 // pred_region
    _
  $region13: #{forward.1} parent=0 // pred_fallthru
    _
  // Predicated region
  $region14: #{forward.1} parent=0 // pred_check
    _
  $region15: #{forward.1} parent=0 // pred_check_branch
    %504 = sbr.rel (0) target = $region17
  $region16: #{forward.1} parent=0 // pred_region
    _
  $region17: #{forward.1} parent=0 // pred_fallthru
    _

</llo_original>
